<compile_context>
chip_gen: v6e
topology: v6e:2x2x1
jax: 0.10.0
libtpu: 0.0.40
codegen_flags: <defaults>
</compile_context>

<pallas_src>
import functools

import numpy as np

import jax
import jax.numpy as jnp
from jax.experimental import pallas as pl
from jax.experimental.pallas import tpu as pltpu

_SUBLANES = 8
_LANES = 128
_MAX_BLOCK_ROWS = 2048  # (2048,128) f32 = 1 MiB / block / input (v5e-safe cap)


# ---------------------------------------------------------------------------
# SignalDistortionRatio — Pallas kernel
# ---------------------------------------------------------------------------
def _sdr_partial_kernel(p_ref, t_ref, pt_ref, pp_ref, *, block_rows, steps, n_valid):
    """Per grid step: fold one (block_rows, 128) tile of p*t and p*p into the
    persistent (1, 8, 128) accumulator blocks for this chunk."""
    c = pl.program_id(0)          # chunk (parallel — megacore on v7x)
    s = pl.program_id(1)          # step within chunk (arbitrary / reduction)

    @pl.when(s == 0)
    def _init():
        pt_ref[...] = jnp.zeros_like(pt_ref)
        pp_ref[...] = jnp.zeros_like(pp_ref)

    # Logical (unclamped) block id -> global row offset of this tile.
    blk = c * steps + s
    row0 = blk * block_rows

    # Validity mask: flat element index < n_valid.  Covers (a) the ragged tail
    # row when n_valid % 128 != 0, (b) the partially out-of-bounds boundary
    # block, and (c) fully phantom blocks of the last chunk (clamped DMA).
    full_rows = n_valid // _LANES          # rows that are completely valid
    rem = n_valid % _LANES                 # valid lanes in the next row
    local_full = full_rows - row0          # scalar (may be <0 or >block_rows)
    row_iota = jax.lax.broadcasted_iota(jnp.int32, (block_rows, _LANES), 0)
    mask = row_iota < local_full
    if rem:
        lane_iota = jax.lax.broadcasted_iota(jnp.int32, (block_rows, _LANES), 1)
        mask = mask | ((row_iota == local_full) & (lane_iota < rem))

    # Native-dtype load, in-kernel upcast (no host cast, no extra HBM bytes).
    p = p_ref[...].astype(jnp.float32)
    t = t_ref[...].astype(jnp.float32)
    zero = jnp.float32(0.0)
    pt = jnp.where(mask, p * t, zero)
    pp = jnp.where(mask, p * p, zero)

    # Pure VPU fold of the block into the (8,128) vector accumulators:
    # (block_rows,128) -> (block_rows//8, 8, 128) -> elementwise vreg adds.
    pt_ref[...] += pt.reshape(-1, _SUBLANES, _LANES).sum(axis=0)[None]
    pp_ref[...] += pp.reshape(-1, _SUBLANES, _LANES).sum(axis=0)[None]


def signal_distortion_ratio(prediction, target, interference=None, *, epsilon=2e-07):
    """Pallas equivalent of SignalDistortionRatio.forward. Returns a scalar f32.

        sdr = -mean(prediction * target)^2 / (mean(prediction^2) + epsilon)
    """
    del interference  # unused in the reference forward pass

    n = int(prediction.size)
    p = prediction.reshape(-1)
    t = target.reshape(-1)

    tile = _SUBLANES * _LANES
    if n % _LANES == 0 and n >= tile:
        # Fast path: no padding, no copy — reshape is a free bitcast under jit.
        rows = n // _LANES
    else:
        # Ragged/tiny fallback: minimal zero pad to a whole (8,128) tile.
        padded = ((n + tile - 1) // tile) * tile
        p = jnp.pad(p, (0, padded - n))
        t = jnp.pad(t, (0, padded - n))
        rows = padded // _LANES

    p2 = p.reshape(rows, _LANES)
    t2 = t.reshape(rows, _LANES)

    block_rows = min(_MAX_BLOCK_ROWS, (rows // _SUBLANES) * _SUBLANES)
    total_blocks = -(-rows // block_rows)
    num_chunks = 2 if total_blocks >= 2 else 1      # 2 TCs on v7x; no-op on v5e/v6e
    steps = -(-total_blocks // num_chunks)
    last_block = total_blocks - 1

    kernel = functools.partial(
        _sdr_partial_kernel, block_rows=block_rows, steps=steps, n_valid=n)

    def in_map(c, s):
        # Clamp so phantom steps of the last chunk re-read the final block
        # (their contribution is masked to zero in-kernel).
        return (jnp.minimum(c * steps + s, last_block), 0)

    def out_map(c, s):
        return (c, 0, 0)

    pt_part, pp_part = pl.pallas_call(
        kernel,
        out_shape=(
            jax.ShapeDtypeStruct((num_chunks, _SUBLANES, _LANES), jnp.float32),
            jax.ShapeDtypeStruct((num_chunks, _SUBLANES, _LANES), jnp.float32),
        ),
        grid_spec=pltpu.PrefetchScalarGridSpec(
            num_scalar_prefetch=0,
            grid=(num_chunks, steps),
            in_specs=[
                pl.BlockSpec((block_rows, _LANES), in_map),
                pl.BlockSpec((block_rows, _LANES), in_map),
            ],
            out_specs=[
                pl.BlockSpec((1, _SUBLANES, _LANES), out_map),
                pl.BlockSpec((1, _SUBLANES, _LANES), out_map),
            ],
        ),
        compiler_params=pltpu.CompilerParams(
            dimension_semantics=("parallel", "arbitrary"),
        ),
    )(p2, t2)

    # Tiny epilogue in plain JAX: combine per-chunk lane-dense partial sums.
    inv_n = jnp.float32(1.0 / n)
    mean_pt = jnp.sum(pt_part) * inv_n
    mean_pp = jnp.sum(pp_part) * inv_n
    return -(mean_pt * mean_pt) / (mean_pp + jnp.float32(epsilon))


# ---------------------------------------------------------------------------
# ShortTimeObjectiveIntelligibility — plain JAX (see TODO(synk) above)
# ---------------------------------------------------------------------------
_STOI_FS = 16000
_STOI_NUM_BANDS = 15
_STOI_CENTER_FREQ = 150
_STOI_FFT_SIZE = 512
_STOI_FFT_IN = 256
_STOI_HOP = 128
_STOI_NUM_FRAMES = 30
_STOI_BETA = 1.0 + 10.0 ** (15.0 / 20.0)
_STOI_FFT_PAD = (_STOI_FFT_SIZE - _STOI_FFT_IN) // 2
_STOI_ROWS = _STOI_FFT_SIZE // 2 + 1


def _get_octave_mat(fs, nfft, numBands, mn):
    f = np.linspace(0, fs, nfft + 1)
    f = f[:int(nfft / 2) + 1]
    k = np.arange(float(numBands))
    cf = 2 ** (k / 3) * mn
    fl = np.sqrt(2.0 ** (k / 3) * mn * 2 ** ((k - 1.0) / 3) * mn)
    fr = np.sqrt(2.0 ** (k / 3) * mn * 2 ** ((k + 1.0) / 3) * mn)
    A = np.zeros((numBands, len(f)))
    for i in range(len(cf)):
        b = np.argmin((f - fl[i]) ** 2)
        fl[i] = f[b]
        fl_ii = b
        b = np.argmin((f - fr[i]) ** 2)
        fr[i] = f[b]
        fr_ii = b
        A[i, np.arange(fl_ii, fr_ii)] = 1
    rnk = np.sum(A, axis=1)
    numBands = np.where((rnk[1:] >= rnk[:-1]) & (rnk[1:] != 0))[-1][-1] + 1
    A = A[:numBands + 1, :]
    cf = cf[:numBands + 1]
    return A, cf


def _build_stoi_mats():
    window = np.hanning(_STOI_FFT_IN)
    window = np.concatenate([np.zeros(_STOI_FFT_PAD), window, np.zeros(_STOI_FFT_PAD)])
    fft = np.fft.fft(np.eye(_STOI_FFT_SIZE))
    fftm = np.vstack((np.real(fft[:_STOI_ROWS, :]), np.imag(fft[:_STOI_ROWS, :])))
    fftm = window * fftm
    octmat, _ = _get_octave_mat(_STOI_FS, _STOI_FFT_SIZE, _STOI_NUM_BANDS,
                                _STOI_CENTER_FREQ)
    return fftm.astype(np.float32), octmat.astype(np.float32)


_FFTMAT_NP, _OCTMAT_NP = _build_stoi_mats()


def _stft_mag(seq, fftmat):
    """Equivalent of ShortTimeObjectiveIntelligibility._stft magnitude."""
    _, L = seq.shape
    x = jnp.pad(seq, ((0, 0), (_STOI_FFT_PAD, _STOI_FFT_PAD)))
    T = (L + 2 * _STOI_FFT_PAD - _STOI_FFT_SIZE) // _STOI_HOP + 1
    idx = np.arange(T)[:, None] * _STOI_HOP + np.arange(_STOI_FFT_SIZE)[None, :]
    frames = x[:, idx]                                  # (B, T, 512)
    stft = jnp.einsum("btn,on->bot", frames, fftmat)    # (B, 514, T)
    real = stft[:, :_STOI_ROWS, :]
    imag = stft[:, _STOI_ROWS:, :]
    return jnp.sqrt(real * real + imag * imag)          # (B, 257, T)


def short_time_objective_intelligibility(prediction, target, interference=None):
    del interference  # unused in the reference forward pass
    fftmat = jnp.asarray(_FFTMAT_NP)
    octmat = jnp.asarray(_OCTMAT_NP)

    pred_mag = _stft_mag(prediction.astype(jnp.float32), fftmat)
    targ_mag = _stft_mag(target.astype(jnp.float32), fftmat)
    pred_mag = jnp.transpose(pred_mag, (0, 2, 1))       # (B, T, 257)
    targ_mag = jnp.transpose(targ_mag, (0, 2, 1))

    x = jnp.sqrt(jnp.matmul(targ_mag ** 2, octmat.T))   # F.linear -> (B, T, bands)
    y = jnp.sqrt(jnp.matmul(pred_mag ** 2, octmat.T))
    x = jnp.transpose(x, (0, 2, 1))                     # (B, bands, T)
    y = jnp.transpose(y, (0, 2, 1))

    T = x.shape[-1]
    S = T - _STOI_NUM_FRAMES
    if S < 1:
        raise ValueError("input too short for STOI: need > %d STFT frames, got %d"
                         % (_STOI_NUM_FRAMES, T))

    # Segment s covers frames [s, s+30), s = 0..S-1 (matches the PyTorch loop).
    seg_idx = np.arange(S)[:, None] + np.arange(_STOI_NUM_FRAMES)[None, :]
    x_seg = x[:, :, seg_idx]                            # (B, bands, S, 30)
    y_seg = y[:, :, seg_idx]

    alpha = jnp.sqrt(jnp.sum(x_seg ** 2, axis=-1, keepdims=True)
                     / (jnp.sum(y_seg ** 2, axis=-1, keepdims=True) + 1e-07))
    y_prime = jnp.minimum(alpha * y_seg, _STOI_BETA * x_seg)

    xn = x_seg - jnp.mean(x_seg, axis=-1, keepdims=True)
    xn = xn / jnp.sqrt(jnp.sum(xn ** 2, axis=-1, keepdims=True))
    yn = y_prime - jnp.mean(y_prime, axis=-1, keepdims=True)
    yn = yn / jnp.sqrt(jnp.sum(yn ** 2, axis=-1, keepdims=True))
    r = jnp.mean(jnp.sum(xn * yn, axis=-1), axis=(0, 1))  # (S,)
    corr = jnp.sum(r)
    return -corr / S


# ---------------------------------------------------------------------------
# CombinedSDRSTOI
# ---------------------------------------------------------------------------
def combined_sdr_stoi(prediction, target, interference=None, weight=1.0,
                      epsilon=2e-07):
    sdr = signal_distortion_ratio(prediction, target, interference, epsilon=epsilon)
    stoi = short_time_objective_intelligibility(prediction, target, interference)
    return (1.0 - weight) * sdr + weight * stoi


if __name__ == "__main__":
    key = jax.random.PRNGKey(0)
    k1, k2, k3 = jax.random.split(key, 3)

    # Audio-like shape implied by the STOI branch: (batch, samples).
    # 4352 samples -> 33 STFT frames -> 3 STOI segments; SDR over 8704 elems.
    batch, samples = 2, 4352
    prediction = jax.random.normal(k1, (batch, samples), dtype=jnp.float32)
    target = jax.random.normal(k2, (batch, samples), dtype=jnp.float32)
    interference = jax.random.normal(k3, (batch, samples), dtype=jnp.float32)

    # --- Pallas SDR kernel vs plain-JAX reference of the PyTorch SDR forward.
    sdr_fn = jax.jit(lambda p, t, i: signal_distortion_ratio(p, t, i))
    sdr = jax.block_until_ready(sdr_fn(prediction, target, interference))
    sdr_ref = -(jnp.mean(prediction * target) ** 2) / (jnp.mean(prediction ** 2) + 2e-07)
    assert jnp.allclose(sdr, sdr_ref, rtol=1e-5, atol=1e-6), (sdr, sdr_ref)

    # Extra SDR coverage: NCHW-shaped and ragged inputs (masking / pad path).
    for shape in [(2, 4, 16, 16), (3, 5, 7)]:
        a = jax.random.normal(k1, shape, dtype=jnp.float32)
        b = jax.random.normal(k2, shape, dtype=jnp.float32)
        got = signal_distortion_ratio(a, b)
        want = -(jnp.mean(a * b) ** 2) / (jnp.mean(a ** 2) + 2e-07)
        assert jnp.allclose(got, want, rtol=1e-5, atol=1e-6), (shape, got, want)

    # --- Full CombinedSDRSTOI forward (module default weight=1).
    combined_fn = jax.jit(lambda p, t, i: combined_sdr_stoi(p, t, i, weight=1.0))
    combined = jax.block_until_ready(combined_fn(prediction, target, interference))
    assert bool(jnp.isfinite(combined)), combined

    # Also exercise a mixed weight so the Pallas SDR term reaches the output.
    mixed_fn = jax.jit(lambda p, t, i: combined_sdr_stoi(p, t, i, weight=0.5))
    mixed = jax.block_until_ready(mixed_fn(prediction, target, interference))
    assert bool(jnp.isfinite(mixed)), mixed

    print("KERNEL_OK")
</pallas_src>

<mosaic_0001>
module attributes {stable_mosaic.version = 11 : i64} {
  func.func @_sdr_partial_kernel(%arg0: i32, %arg1: i32, %arg2: memref<64x128xf32, #tpu.memory_space<vmem>>, %arg3: memref<64x128xf32, #tpu.memory_space<vmem>>, %arg4: memref<1x8x128xf32, #tpu.memory_space<vmem>>, %arg5: memref<1x8x128xf32, #tpu.memory_space<vmem>>) attributes {dimension_semantics = [#tpu.dimension_semantics<parallel>, #tpu.dimension_semantics<arbitrary>], iteration_bounds = array<i64: 2, 1>, scalar_prefetch = 0 : i64, scratch_operands = 0 : i64, tpu.core_type = #tpu.core_type<tc>, window_params = [{transform_indices = @transform_0, window_bounds = array<i64: 64, 128>}, {transform_indices = @transform_1, window_bounds = array<i64: 64, 128>}, {transform_indices = @transform_2, window_bounds = array<i64: 1, 8, 128>}, {transform_indices = @transform_3, window_bounds = array<i64: 1, 8, 128>}]} {
    %c0_i32 = arith.constant 0 : i32
    %0 = arith.cmpi eq, %arg1, %c0_i32 : i32
    %1 = arith.extui %0 : i1 to i32
    %c0_i32_0 = arith.constant 0 : i32
    %2 = arith.cmpi ne, %1, %c0_i32_0 : i32
    scf.if %2 {
      %cst_19 = arith.constant 0.000000e+00 : f32
      %30 = vector.broadcast %cst_19 : f32 to vector<1x8x128xf32>
      %c0_20 = arith.constant 0 : index
      %c0_21 = arith.constant 0 : index
      %c0_22 = arith.constant 0 : index
      %31 = vector.load %arg4[%c0_20, %c0_21, %c0_22] : memref<1x8x128xf32, #tpu.memory_space<vmem>>, vector<1x8x128xf32>
      tpu.vector_store %arg4[%c0_20, %c0_21, %c0_22], %30 {strides = array<i32>} : memref<1x8x128xf32, #tpu.memory_space<vmem>>, vector<1x8x128xf32>,
      %cst_23 = arith.constant 0.000000e+00 : f32
      %32 = vector.broadcast %cst_23 : f32 to vector<1x8x128xf32>
      %c0_24 = arith.constant 0 : index
      %c0_25 = arith.constant 0 : index
      %c0_26 = arith.constant 0 : index
      %33 = vector.load %arg5[%c0_24, %c0_25, %c0_26] : memref<1x8x128xf32, #tpu.memory_space<vmem>>, vector<1x8x128xf32>
      tpu.vector_store %arg5[%c0_24, %c0_25, %c0_26], %32 {strides = array<i32>} : memref<1x8x128xf32, #tpu.memory_space<vmem>>, vector<1x8x128xf32>,
    } else {
    }
    %c1_i32 = arith.constant 1 : i32
    %3 = arith.muli %arg0, %c1_i32 : i32
    %4 = arith.addi %3, %arg1 : i32
    %c64_i32 = arith.constant 64 : i32
    %5 = arith.muli %4, %c64_i32 : i32
    %c68_i32 = arith.constant 68 : i32
    %6 = arith.subi %c68_i32, %5 : i32
    %7 = tpu.iota {dimensions = array<i32: 0>} : vector<64x128xi32>
    %8 = vector.broadcast %6 : i32 to vector<64x128xi32>
    %9 = arith.cmpi slt, %7, %8 : vector<64x128xi32>
    %c0 = arith.constant 0 : index
    %c0_1 = arith.constant 0 : index
    %10 = vector.load %arg2[%c0, %c0_1] : memref<64x128xf32, #tpu.memory_space<vmem>>, vector<64x128xf32>
    %c0_2 = arith.constant 0 : index
    %c0_3 = arith.constant 0 : index
    %11 = vector.load %arg3[%c0_2, %c0_3] : memref<64x128xf32, #tpu.memory_space<vmem>>, vector<64x128xf32>
    %12 = arith.mulf %10, %11 : vector<64x128xf32>
    %cst = arith.constant 0.000000e+00 : f32
    %13 = vector.broadcast %cst : f32 to vector<64x128xf32>
    %14 = arith.select %9, %12, %13 : vector<64x128xi1>, vector<64x128xf32>
    %15 = arith.mulf %10, %10 : vector<64x128xf32>
    %cst_4 = arith.constant 0.000000e+00 : f32
    %16 = vector.broadcast %cst_4 : f32 to vector<64x128xf32>
    %17 = arith.select %9, %15, %16 : vector<64x128xi1>, vector<64x128xf32>
    %c0_5 = arith.constant 0 : index
    %c0_6 = arith.constant 0 : index
    %c0_7 = arith.constant 0 : index
    %18 = vector.load %arg4[%c0_5, %c0_6, %c0_7] : memref<1x8x128xf32, #tpu.memory_space<vmem>>, vector<1x8x128xf32>
    %19 = vector.shape_cast %14 : vector<64x128xf32> to vector<8x8x128xf32>
    %cst_8 = arith.constant dense<0.000000e+00> : vector<8x128xf32>
    %20 = vector.multi_reduction <add>, %19, %cst_8 [0] : vector<8x8x128xf32> to vector<8x128xf32>
    %21 = vector.shape_cast %20 : vector<8x128xf32> to vector<1x8x128xf32>
    %22 = arith.addf %18, %21 : vector<1x8x128xf32>
    %c0_9 = arith.constant 0 : index
    %c0_10 = arith.constant 0 : index
    %c0_11 = arith.constant 0 : index
    %23 = vector.load %arg4[%c0_9, %c0_10, %c0_11] : memref<1x8x128xf32, #tpu.memory_space<vmem>>, vector<1x8x128xf32>
    tpu.vector_store %arg4[%c0_9, %c0_10, %c0_11], %22 {strides = array<i32>} : memref<1x8x128xf32, #tpu.memory_space<vmem>>, vector<1x8x128xf32>,
    %c0_12 = arith.constant 0 : index
    %c0_13 = arith.constant 0 : index
    %c0_14 = arith.constant 0 : index
    %24 = vector.load %arg5[%c0_12, %c0_13, %c0_14] : memref<1x8x128xf32, #tpu.memory_space<vmem>>, vector<1x8x128xf32>
    %25 = vector.shape_cast %17 : vector<64x128xf32> to vector<8x8x128xf32>
    %cst_15 = arith.constant dense<0.000000e+00> : vector<8x128xf32>
    %26 = vector.multi_reduction <add>, %25, %cst_15 [0] : vector<8x8x128xf32> to vector<8x128xf32>
    %27 = vector.shape_cast %26 : vector<8x128xf32> to vector<1x8x128xf32>
    %28 = arith.addf %24, %27 : vector<1x8x128xf32>
    %c0_16 = arith.constant 0 : index
    %c0_17 = arith.constant 0 : index
    %c0_18 = arith.constant 0 : index
    %29 = vector.load %arg5[%c0_16, %c0_17, %c0_18] : memref<1x8x128xf32, #tpu.memory_space<vmem>>, vector<1x8x128xf32>
    tpu.vector_store %arg5[%c0_16, %c0_17, %c0_18], %28 {strides = array<i32>} : memref<1x8x128xf32, #tpu.memory_space<vmem>>, vector<1x8x128xf32>,
    return
  }
  func.func @transform_0(%arg0: i32, %arg1: i32) -> (i32, i32) {
    %c1_i32 = arith.constant 1 : i32
    %0 = arith.muli %arg0, %c1_i32 : i32
    %1 = arith.addi %0, %arg1 : i32
    %c1_i32_0 = arith.constant 1 : i32
    %2 = arith.minsi %1, %c1_i32_0 : i32
    %c0_i32 = arith.constant 0 : i32
    %c0_i32_1 = arith.constant 0 : i32
    return %2, %c0_i32 : i32, i32
  }
  func.func @transform_1(%arg0: i32, %arg1: i32) -> (i32, i32) {
    %c1_i32 = arith.constant 1 : i32
    %0 = arith.muli %arg0, %c1_i32 : i32
    %1 = arith.addi %0, %arg1 : i32
    %c1_i32_0 = arith.constant 1 : i32
    %2 = arith.minsi %1, %c1_i32_0 : i32
    %c0_i32 = arith.constant 0 : i32
    %c0_i32_1 = arith.constant 0 : i32
    return %2, %c0_i32 : i32, i32
  }
  func.func @transform_2(%arg0: i32, %arg1: i32) -> (i32, i32, i32) {
    %c0_i32 = arith.constant 0 : i32
    %c0_i32_0 = arith.constant 0 : i32
    %c0_i32_1 = arith.constant 0 : i32
    return %arg0, %c0_i32, %c0_i32_0 : i32, i32, i32
  }
  func.func @transform_3(%arg0: i32, %arg1: i32) -> (i32, i32, i32) {
    %c0_i32 = arith.constant 0 : i32
    %c0_i32_0 = arith.constant 0 : i32
    %c0_i32_1 = arith.constant 0 : i32
    return %arg0, %c0_i32, %c0_i32_0 : i32, i32, i32
  }
}

</mosaic_0001>

<llo_original>
// kernel: _lambda_.1
$region0: #{_lambda_.1}
  #allocation0 [shape = 'u32[]', space=smem, size = 0x4, offset = 0x4, fixed_abs, tag = 'smem constant byte address 0x4 - core index']
  #allocation1 [shape = 'u32[144,128]{1,0:T(1,128)}', space=vmem, size = 0x12000, scoped, tag = 'internal scratch']
  %s0 = inlined_call_operand.vmem [shape: f32[68,128], index: 0, kind: input, shape index: {}]
  %s1 = inlined_call_operand.vmem [shape: f32[68,128], index: 1, kind: input, shape index: {}]
  %s2 = inlined_call_operand.vmem [shape: f32[2,8,128], index: 2, kind: output, shape index: {0}]
  %s3 = inlined_call_operand.vmem [shape: f32[2,8,128], index: 3, kind: output, shape index: {1}]
  %4 = xla_tuple %s2, %s3
  %s5 = sld [smem:[#allocation0]]
  $region53: #{_lambda_.1} parent=0
    _
  %s7 = ssub.s32 1, %s5
  %s8 = scalar_select 0, %s7, %s5
  loop: start=0, step=1, limit=4
  $region2: #{_lambda_.1} parent=0 // loop_pre_header
    _
  $region3: #{_lambda_.1} parent=0 // loop_header
    %s10 = sphi 0, %s14
    %p11 = scmp.ge.s32.totalorder %s10, 4
    %s17 = sphi 0, %s29
    %s18 = sphi 0, %s25
    %s19 = sphi 0, %s17
    %s20 = sphi 0, %s18
    %s21 = sphi 0, %s19
    %s22 = sphi 0, %s20
    %s38 = sphi 0, %s40
    %s41 = sphi 0, %s38
    %s42 = sphi 0, %s41
    %s58 = sphi 0, %s42
    %s70 = sphi 0, %s72
    %s73 = sphi 0, %s70
    %s74 = sphi 0, %s73
    %s90 = sphi 0, %s74
    %s96 = sphi 0, %s98
    %s99 = sphi 0, %s96
    %s100 = sphi 0, %s99
    %s116 = sphi 0, %s100
    %s122 = sphi 0, %s124
    %s125 = sphi 0, %s122
    %s126 = sphi 0, %s125
    %s142 = sphi 0, %s126
  $region4: #{_lambda_.1} parent=0 // loop_header_branch
    %13 = sbr.rel (%p11) target = $region8
  $region5: #{_lambda_.1} parent=0 // loop_body
    %s15 = ssub.s32 %s10, 1
    %s16 = ssub.s32 %s10, 2
    %s23 = sadd.s32 1, %s18
    %p24 = scmp.ge.s32.totalorder %s23, 1
    %s25 = scalar_select %p24, 0, %s23
    %s26 = sadd.s32 1, %s17
    %s27 = scalar_select %p24, %s26, %s17
    %p28 = scmp.ge.s32.totalorder %s27, 2
    %s29 = scalar_select %p28, 0, %s27
    %s30 = sadd.s32 %s17, %s18
    %p31 = scmp.lt.s32.totalorder %s30, 1
    %s32 = scalar_select %p31, %s30, 1
    %s33 = sadd.s32 %s29, %s25
    %p34 = scmp.lt.s32.totalorder %s33, 1
    %s35 = scalar_select %p34, %s33, 1
    %s36 = ssub.s32 %s32, %s35
    %p37 = scmp.eq.s32.totalorder %s36, 0
    %s39 = sadd.s32 %s38, 1
    %s40 = scalar_select %p37, %s38, %s39
    %p43 = pneg %p37
    %p44 = scmp.eq.s32.totalorder %s10, 1
    %p45 = por %p43, %p44
    %p46 = scmp.ne.s32.totalorder %s38, %s41
    %p47 = scmp.eq.s32.totalorder %s10, 0
    %p48 = por %p46, %p47
    %p49 = scmp.ne.s32.totalorder %s38, %s41
    %p50 = scmp.eq.s32.totalorder %s15, 1
    %p51 = por %p49, %p50
    %p52 = scmp.ne.s32.totalorder %s41, %s42
    %p53 = scmp.eq.s32.totalorder %s15, 0
    %p54 = por %p52, %p53
    %p55 = scmp.ne.s32.totalorder %s41, %s42
    %p56 = scmp.eq.s32.totalorder %s16, 1
    %p57 = por %p55, %p56
    %p59 = scmp.ne.s32.totalorder %s42, %s58
    %p60 = scmp.eq.s32.totalorder %s16, 0
    %p61 = por %p59, %p60
    %s62 = sadd.s32 %s17, %s18
    %p63 = scmp.lt.s32.totalorder %s62, 1
    %s64 = scalar_select %p63, %s62, 1
    %s65 = sadd.s32 %s29, %s25
    %p66 = scmp.lt.s32.totalorder %s65, 1
    %s67 = scalar_select %p66, %s65, 1
    %s68 = ssub.s32 %s64, %s67
    %p69 = scmp.eq.s32.totalorder %s68, 0
    %s71 = sadd.s32 %s70, 1
    %s72 = scalar_select %p69, %s70, %s71
    %p75 = pneg %p69
    %p76 = scmp.eq.s32.totalorder %s10, 1
    %p77 = por %p75, %p76
    %p78 = scmp.ne.s32.totalorder %s70, %s73
    %p79 = scmp.eq.s32.totalorder %s10, 0
    %p80 = por %p78, %p79
    %p81 = scmp.ne.s32.totalorder %s70, %s73
    %p82 = scmp.eq.s32.totalorder %s15, 1
    %p83 = por %p81, %p82
    %p84 = scmp.ne.s32.totalorder %s73, %s74
    %p85 = scmp.eq.s32.totalorder %s15, 0
    %p86 = por %p84, %p85
    %p87 = scmp.ne.s32.totalorder %s73, %s74
    %p88 = scmp.eq.s32.totalorder %s16, 1
    %p89 = por %p87, %p88
    %p91 = scmp.ne.s32.totalorder %s74, %s90
    %p92 = scmp.eq.s32.totalorder %s16, 0
    %p93 = por %p91, %p92
    %s94 = ssub.s32 %s17, %s29
    %p95 = scmp.eq.s32.totalorder %s94, 0
    %s97 = sadd.s32 %s96, 1
    %s98 = scalar_select %p95, %s96, %s97
    %p101 = pneg %p95
    %p102 = scmp.eq.s32.totalorder %s10, 1
    %p103 = por %p101, %p102
    %p104 = scmp.ne.s32.totalorder %s96, %s99
    %p105 = scmp.eq.s32.totalorder %s10, 0
    %p106 = por %p104, %p105
    %p107 = scmp.ne.s32.totalorder %s96, %s99
    %p108 = scmp.eq.s32.totalorder %s15, 1
    %p109 = por %p107, %p108
    %p110 = scmp.ne.s32.totalorder %s99, %s100
    %p111 = scmp.eq.s32.totalorder %s15, 0
    %p112 = por %p110, %p111
    %p113 = scmp.ne.s32.totalorder %s99, %s100
    %p114 = scmp.eq.s32.totalorder %s16, 1
    %p115 = por %p113, %p114
    %p117 = scmp.ne.s32.totalorder %s100, %s116
    %p118 = scmp.eq.s32.totalorder %s16, 0
    %p119 = por %p117, %p118
    %s120 = ssub.s32 %s17, %s29
    %p121 = scmp.eq.s32.totalorder %s120, 0
    %s123 = sadd.s32 %s122, 1
    %s124 = scalar_select %p121, %s122, %s123
    %p127 = pneg %p121
    %p128 = scmp.eq.s32.totalorder %s10, 1
    %p129 = por %p127, %p128
    %p130 = scmp.ne.s32.totalorder %s122, %s125
    %p131 = scmp.eq.s32.totalorder %s10, 0
    %p132 = por %p130, %p131
    %p133 = scmp.ne.s32.totalorder %s122, %s125
    %p134 = scmp.eq.s32.totalorder %s15, 1
    %p135 = por %p133, %p134
    %p136 = scmp.ne.s32.totalorder %s125, %s126
    %p137 = scmp.eq.s32.totalorder %s15, 0
    %p138 = por %p136, %p137
    %p139 = scmp.ne.s32.totalorder %s125, %s126
    %p140 = scmp.eq.s32.totalorder %s16, 1
    %p141 = por %p139, %p140
    %p143 = scmp.ne.s32.totalorder %s126, %s142
    %p144 = scmp.eq.s32.totalorder %s16, 0
    %p145 = por %p143, %p144
    %p146 = scmp.le.s32.totalorder 1, %s10
    %p147 = scmp.lt.s32.totalorder %s10, 3
    %p148 = pnand %p146, %p147
    %p149 = pneg %p148
    // Predicated region
    $region9: #{_lambda_.1} parent=5 // pred_check
      _
    $region10: #{_lambda_.1} parent=5 // pred_check_branch
      %151 = sbr.rel (%p148) target = $region12
    $region11: #{_lambda_.1} parent=5 // pred_region
      %s152 = ssub.s32 %s10, 1
    $region12: #{_lambda_.1} parent=5 // pred_fallthru
      _
    %p153 = scmp.lt.s32.totalorder %s10, 2
    // Predicated region
    $region13: #{_lambda_.1} parent=5 // pred_check
      %p154 = pneg %p153
    $region14: #{_lambda_.1} parent=5 // pred_check_branch
      %156 = sbr.rel (%p154) target = $region16
    $region15: #{_lambda_.1} parent=5 // pred_region
      // Predicated region
      $region17: #{_lambda_.1} parent=15 // pred_check
        %p157 = pneg %p48
      $region18: #{_lambda_.1} parent=15 // pred_check_branch
        %159 = sbr.rel (%p157) target = $region20
      $region19: #{_lambda_.1} parent=15 // pred_region
        %s160 = sadd.s32 %s17, %s18
        %p161 = scmp.lt.s32.totalorder %s160, 1
        %s162 = scalar_select %p161, %s160, 1
        %s163 = smul.u32 8, %s162
        %s164 = ssub.s32 9, %s163
        %p165 = scmp.lt.s32.totalorder %s164, 8
        %s166 = scalar_select %p165, %s164, 8
        %s167 = smul.u32 128, %s166
        %p168 = scmp.lt.s32.totalorder %s163, 8
        %s169 = scalar_select %p168, %s163, 8
        %s170 = smul.addr %s169, 8
        %s171 = scalar_lea.vmem %s0, %s170
        %s172 = sadd.s32 %s17, %s18
        %p173 = scmp.lt.s32.totalorder %s172, 1
        %s174 = scalar_select %p173, %s172, 1
        %s175 = smul.u32 8, %s174
        %s176 = ssub.s32 9, %s175
        %p177 = scmp.lt.s32.totalorder %s176, 8
        %s178 = scalar_select %p177, %s176, 8
        %s179 = smul.u32 128, %s178
      $region20: #{_lambda_.1} parent=15 // pred_fallthru
        _
      // Predicated region
      $region21: #{_lambda_.1} parent=15 // pred_check
        %p180 = pneg %p80
      $region22: #{_lambda_.1} parent=15 // pred_check_branch
        %182 = sbr.rel (%p180) target = $region24
      $region23: #{_lambda_.1} parent=15 // pred_region
        %s183 = sadd.s32 %s17, %s18
        %p184 = scmp.lt.s32.totalorder %s183, 1
        %s185 = scalar_select %p184, %s183, 1
        %s186 = smul.u32 8, %s185
        %s187 = ssub.s32 9, %s186
        %p188 = scmp.lt.s32.totalorder %s187, 8
        %s189 = scalar_select %p188, %s187, 8
        %s190 = smul.u32 128, %s189
        %p191 = scmp.lt.s32.totalorder %s186, 8
        %s192 = scalar_select %p191, %s186, 8
        %s193 = smul.addr %s192, 8
        %s194 = scalar_lea.vmem %s1, %s193
        %s195 = sadd.s32 %s17, %s18
        %p196 = scmp.lt.s32.totalorder %s195, 1
        %s197 = scalar_select %p196, %s195, 1
        %s198 = smul.u32 8, %s197
        %s199 = ssub.s32 9, %s198
        %p200 = scmp.lt.s32.totalorder %s199, 8
        %s201 = scalar_select %p200, %s199, 8
        %s202 = smul.u32 128, %s201
      $region24: #{_lambda_.1} parent=15 // pred_fallthru
        _
    $region16: #{_lambda_.1} parent=5 // pred_fallthru
      _
    %p203 = scmp.le.s32.totalorder 1, %s10
    %p204 = scmp.lt.s32.totalorder %s10, 3
    %p205 = pnand %p203, %p204
    %p206 = pneg %p205
    // Predicated region
    $region25: #{_lambda_.1} parent=5 // pred_check
      _
    $region26: #{_lambda_.1} parent=5 // pred_check_branch
      %208 = sbr.rel (%p205) target = $region28
    $region27: #{_lambda_.1} parent=5 // pred_region
      %s209 = ssub.s32 %s10, 1
      %s210 = sadd.s32 %s19, %s20
      %p211 = scmp.lt.s32.totalorder %s210, 1
      %s212 = scalar_select %p211, %s210, 1
      %s213 = smul.u32 8, %s212
      %s214 = ssub.s32 9, %s213
      %p215 = scmp.lt.s32.totalorder %s214, 8
      %s216 = scalar_select %p215, %s214, 8
      %s217 = smul.u32 128, %s216
      %p218 = scmp.lt.s32.totalorder %s213, 8
      %s219 = scalar_select %p218, %s213, 8
      %s220 = smul.addr %s219, 8
      %s221 = scalar_lea.vmem %s0, %s220
      %p222 = pneg %p54
      %p223 = pneg %p51
      %s224 = sadd.s32 %s19, %s20
      %p225 = scmp.lt.s32.totalorder %s224, 1
      %s226 = scalar_select %p225, %s224, 1
      %s227 = smul.u32 8, %s226
      %s228 = ssub.s32 9, %s227
      %p229 = scmp.lt.s32.totalorder %s228, 8
      %s230 = scalar_select %p229, %s228, 8
      %s231 = smul.u32 128, %s230
      %p232 = scmp.lt.s32.totalorder %s227, 8
      %s233 = scalar_select %p232, %s227, 8
      %s234 = smul.addr %s233, 8
      %s235 = scalar_lea.vmem %s1, %s234
      %p236 = pneg %p86
      %p237 = pneg %p83
      %p238 = pneg %p112
      %p239 = pneg %p109
      %p240 = scmp.lt.s32.totalorder %s19, 1
      %s241 = scalar_select %p240, %s19, 1
      %s242 = smul.addr %s241, 8
      %s243 = scalar_lea.vmem %s2, %s242
      %p244 = pneg %p138
      %p245 = pneg %p135
      %p246 = scmp.lt.s32.totalorder %s19, 1
      %s247 = scalar_select %p246, %s19, 1
      %s248 = smul.addr %s247, 8
      %s249 = scalar_lea.vmem %s3, %s248
      %s250 = sadd.s32 %s19, %s20
      %p251 = scmp.lt.s32.totalorder %s250, 1
      %s252 = scalar_select %p251, %s250, 1
      %s253 = smul.u32 8, %s252
      %s254 = ssub.s32 9, %s253
      %p255 = scmp.lt.s32.totalorder %s254, 8
      %s256 = scalar_select %p255, %s254, 8
      %s257 = smul.u32 128, %s256
      %p258 = scmp.lt.s32.totalorder %s253, 8
      %s259 = scalar_select %p258, %s253, 8
      %s260 = smul.addr %s259, 8
      %s261 = scalar_lea.vmem %s0, %s260
      %s262 = sadd.s32 %s19, %s20
      %p263 = scmp.lt.s32.totalorder %s262, 1
      %s264 = scalar_select %p263, %s262, 1
      %s265 = smul.u32 8, %s264
      %s266 = ssub.s32 9, %s265
      %p267 = scmp.lt.s32.totalorder %s266, 8
      %s268 = scalar_select %p267, %s266, 8
      %s269 = smul.u32 128, %s268
      %s270 = sadd.s32 %s19, %s20
      %p271 = scmp.lt.s32.totalorder %s270, 1
      %s272 = scalar_select %p271, %s270, 1
      %s273 = smul.u32 8, %s272
      %s274 = ssub.s32 9, %s273
      %p275 = scmp.lt.s32.totalorder %s274, 8
      %s276 = scalar_select %p275, %s274, 8
      %s277 = smul.u32 128, %s276
      %p278 = scmp.lt.s32.totalorder %s273, 8
      %s279 = scalar_select %p278, %s273, 8
      %s280 = smul.addr %s279, 8
      %s281 = scalar_lea.vmem %s1, %s280
      %s282 = sadd.s32 %s19, %s20
      %p283 = scmp.lt.s32.totalorder %s282, 1
      %s284 = scalar_select %p283, %s282, 1
      %s285 = smul.u32 8, %s284
      %s286 = ssub.s32 9, %s285
      %p287 = scmp.lt.s32.totalorder %s286, 8
      %s288 = scalar_select %p287, %s286, 8
      %s289 = smul.u32 128, %s288
      %p290 = scmp.lt.s32.totalorder %s19, 1
      %s291 = scalar_select %p290, %s19, 1
      %s292 = smul.addr %s291, 8
      %s293 = scalar_lea.vmem %s2, %s292
      %p294 = scmp.lt.s32.totalorder %s19, 1
      %s295 = scalar_select %p294, %s19, 1
      %s296 = smul.addr %s295, 8
      %s297 = scalar_lea.vmem %s3, %s296
      %p298 = scmp.eq.s32.totalorder %s20, 0
      // Predicated region
      $region29: #{_lambda_.1} parent=27 // pred_check
        %p299 = pneg %p298
      $region30: #{_lambda_.1} parent=27 // pred_check_branch
        %301 = sbr.rel (%p299) target = $region32
      $region31: #{_lambda_.1} parent=27 // pred_region
        %302 = vst [vmem:[%s293] sm:$0xff] 0.0
        %303 = vst [vmem:[%s297] sm:$0xff] 0.0
      $region32: #{_lambda_.1} parent=27 // pred_fallthru
        _
      %s304 = sadd.s32 %s19, %s20
      %s305 = smul.u32 %s304, 64
      %s306 = ssub.s32 68, %s305
      %v307 = vlaneseq
      %v308 = vshrl.u32 %v307, 7
      %v309 = vadd.s32 %v308, 8
      %v310 = vadd.s32 %v308, 16
      %v311 = vadd.s32 %v308, 24
      %v312 = vadd.s32 %v308, 32
      %v313 = vadd.s32 %v308, 40
      %v314 = vadd.s32 %v308, 48
      %v315 = vadd.s32 %v308, 56
      %v316 = vstv %s306
      %vm317 = vcmp.lt.s32.totalorder %v308, %v316
      %vm318 = vcmp.lt.s32.totalorder %v309, %v316
      %vm319 = vcmp.lt.s32.totalorder %v310, %v316
      %vm320 = vcmp.lt.s32.totalorder %v311, %v316
      %vm321 = vcmp.lt.s32.totalorder %v312, %v316
      %vm322 = vcmp.lt.s32.totalorder %v313, %v316
      %vm323 = vcmp.lt.s32.totalorder %v314, %v316
      %vm324 = vcmp.lt.s32.totalorder %v315, %v316
      %v325 = vld [vmem:[%s261] sm:$0xff]
      %v326 = vld [vmem:[%s261 + $0x8] sm:$0xff]
      %v327 = vld [vmem:[%s261 + $0x10] sm:$0xff]
      %v328 = vld [vmem:[%s261 + $0x18] sm:$0xff]
      %v329 = vld [vmem:[%s261 + $0x20] sm:$0xff]
      %v330 = vld [vmem:[%s261 + $0x28] sm:$0xff]
      %v331 = vld [vmem:[%s261 + $0x30] sm:$0xff]
      %v332 = vld [vmem:[%s261 + $0x38] sm:$0xff]
      %v333 = vld [vmem:[%s281] sm:$0xff]
      %v334 = vld [vmem:[%s281 + $0x8] sm:$0xff]
      %v335 = vld [vmem:[%s281 + $0x10] sm:$0xff]
      %v336 = vld [vmem:[%s281 + $0x18] sm:$0xff]
      %v337 = vld [vmem:[%s281 + $0x20] sm:$0xff]
      %v338 = vld [vmem:[%s281 + $0x28] sm:$0xff]
      %v339 = vld [vmem:[%s281 + $0x30] sm:$0xff]
      %v340 = vld [vmem:[%s281 + $0x38] sm:$0xff]
      %v341 = vmul.f32 %v325, %v333
      %v342 = vmul.f32 %v326, %v334
      %v343 = vmul.f32 %v327, %v335
      %v344 = vmul.f32 %v328, %v336
      %v345 = vmul.f32 %v329, %v337
      %v346 = vmul.f32 %v330, %v338
      %v347 = vmul.f32 %v331, %v339
      %v348 = vmul.f32 %v332, %v340
      %v349 = vsel %vm317, %v341, 0.0
      %v350 = vsel %vm318, %v342, 0.0
      %v351 = vsel %vm319, %v343, 0.0
      %v352 = vsel %vm320, %v344, 0.0
      %v353 = vsel %vm321, %v345, 0.0
      %v354 = vsel %vm322, %v346, 0.0
      %v355 = vsel %vm323, %v347, 0.0
      %v356 = vsel %vm324, %v348, 0.0
      %v357 = vmul.f32 %v325, %v325
      %v358 = vmul.f32 %v326, %v326
      %v359 = vmul.f32 %v327, %v327
      %v360 = vmul.f32 %v328, %v328
      %v361 = vmul.f32 %v329, %v329
      %v362 = vmul.f32 %v330, %v330
      %v363 = vmul.f32 %v331, %v331
      %v364 = vmul.f32 %v332, %v332
      %v365 = vsel %vm317, %v357, 0.0
      %v366 = vsel %vm318, %v358, 0.0
      %v367 = vsel %vm319, %v359, 0.0
      %v368 = vsel %vm320, %v360, 0.0
      %v369 = vsel %vm321, %v361, 0.0
      %v370 = vsel %vm322, %v362, 0.0
      %v371 = vsel %vm323, %v363, 0.0
      %v372 = vsel %vm324, %v364, 0.0
      %v373 = vld [vmem:[%s293] sm:$0xff]
      %v374 = vadd.f32 %v349, %v350
      %v375 = vadd.f32 %v374, %v351
      %v376 = vadd.f32 %v375, %v352
      %v377 = vadd.f32 %v376, %v353
      %v378 = vadd.f32 %v377, %v354
      %v379 = vadd.f32 %v378, %v355
      %v380 = vadd.f32 %v379, %v356
      %v381 = vadd.f32 %v373, %v380
      %382 = vst [vmem:[%s293] sm:$0xff] %v381
      %v383 = vld [vmem:[%s297] sm:$0xff]
      %v384 = vadd.f32 %v365, %v366
      %v385 = vadd.f32 %v384, %v367
      %v386 = vadd.f32 %v385, %v368
      %v387 = vadd.f32 %v386, %v369
      %v388 = vadd.f32 %v387, %v370
      %v389 = vadd.f32 %v388, %v371
      %v390 = vadd.f32 %v389, %v372
      %v391 = vadd.f32 %v383, %v390
      %392 = vst [vmem:[%s297] sm:$0xff] %v391
      %p393 = scmp.lt.s32.totalorder %s19, 1
      %s394 = scalar_select %p393, %s19, 1
      %s395 = smul.addr %s394, 8
      %s396 = scalar_lea.vmem %s2, %s395
      %p397 = scmp.lt.s32.totalorder %s19, 1
      %s398 = scalar_select %p397, %s19, 1
      %s399 = smul.addr %s398, 8
      %s400 = scalar_lea.vmem %s3, %s399
      // Predicated region
      $region33: #{_lambda_.1} parent=27 // pred_check
        %p401 = pneg %p109
      $region34: #{_lambda_.1} parent=27 // pred_check_branch
        %403 = sbr.rel (%p401) target = $region36
      $region35: #{_lambda_.1} parent=27 // pred_region
        _
      $region36: #{_lambda_.1} parent=27 // pred_fallthru
        _
      // Predicated region
      $region37: #{_lambda_.1} parent=27 // pred_check
        %p404 = pneg %p135
      $region38: #{_lambda_.1} parent=27 // pred_check_branch
        %406 = sbr.rel (%p404) target = $region40
      $region39: #{_lambda_.1} parent=27 // pred_region
        _
      $region40: #{_lambda_.1} parent=27 // pred_fallthru
        _
    $region28: #{_lambda_.1} parent=5 // pred_fallthru
      _
    %p407 = scmp.le.s32.totalorder 2, %s10
    // Predicated region
    $region41: #{_lambda_.1} parent=5 // pred_check
      %p408 = pneg %p407
    $region42: #{_lambda_.1} parent=5 // pred_check_branch
      %410 = sbr.rel (%p408) target = $region44
    $region43: #{_lambda_.1} parent=5 // pred_region
      %s411 = ssub.s32 %s10, 2
      // Predicated region
      $region45: #{_lambda_.1} parent=43 // pred_check
        %p412 = pneg %p115
      $region46: #{_lambda_.1} parent=43 // pred_check_branch
        %414 = sbr.rel (%p412) target = $region48
      $region47: #{_lambda_.1} parent=43 // pred_region
        %p415 = scmp.lt.s32.totalorder %s21, 1
        %s416 = scalar_select %p415, %s21, 1
        %s417 = smul.addr %s416, 8
        %s418 = scalar_lea.vmem %s2, %s417
      $region48: #{_lambda_.1} parent=43 // pred_fallthru
        _
      // Predicated region
      $region49: #{_lambda_.1} parent=43 // pred_check
        %p419 = pneg %p141
      $region50: #{_lambda_.1} parent=43 // pred_check_branch
        %421 = sbr.rel (%p419) target = $region52
      $region51: #{_lambda_.1} parent=43 // pred_region
        %p422 = scmp.lt.s32.totalorder %s21, 1
        %s423 = scalar_select %p422, %s21, 1
        %s424 = smul.addr %s423, 8
        %s425 = scalar_lea.vmem %s3, %s424
      $region52: #{_lambda_.1} parent=43 // pred_fallthru
        _
    $region44: #{_lambda_.1} parent=5 // pred_fallthru
      _
  $region6: #{_lambda_.1} parent=0 // loop_footer
    %s14 = sadd.s32 1, %s10
  $region7: #{_lambda_.1} parent=0 // loop_footer_branch
    %9 = sbr.rel target = $region3
  $region8: #{_lambda_.1} parent=0 // loop_exit
    _

</llo_original>
